<compile_context>
chip_gen: v7x
topology: tpu7x:2x2x1
jax: 0.10.0
libtpu: 0.0.40
codegen_flags: <defaults>
</compile_context>

<pallas_src>
import jax
import jax.numpy as jnp
from jax.experimental import pallas as pl
from jax.experimental.pallas import tpu as pltpu

LN_EPS = 1e-5  # torch.nn.LayerNorm default

_VMEM_TARGET = 40 * 1024 * 1024  # conservative: fits v7x (64 MiB/TC) with headroom


def _cdiv(a, b):
    return (a + b - 1) // b


def _round_up(v, m):
    return _cdiv(v, m) * m


def aux_head_kernel(x_ref, w_ref, b_ref, o_ref):
    # x_ref: (tm, D) tile in the input dtype; w_ref: (D, tn) bf16 (gamma folded in);
    # b_ref: (1, tn) f32 (beta folded in); o_ref: (tm, tn) in the output dtype.
    x = x_ref[...].astype(jnp.float32)
    inv_d = jnp.float32(1.0 / x.shape[-1])

    # Independent reductions (pipeline through the XLU): var = E[x^2] - mean^2.
    s1 = jnp.sum(x, axis=-1, keepdims=True)
    s2 = jnp.sum(x * x, axis=-1, keepdims=True)
    mean = s1 * inv_d
    var = jnp.maximum(s2 * inv_d - mean * mean, 0.0)  # guard tiny negative rounding
    xn = (x - mean) * jax.lax.rsqrt(var + LN_EPS)

    # Head GEMM on the MXU: bf16 x bf16 -> f32 accumulate, then the folded bias.
    out = jnp.dot(xn.astype(jnp.bfloat16), w_ref[...],
                  preferred_element_type=jnp.float32)
    out = out + b_ref[...]
    o_ref[...] = out.astype(o_ref.dtype)


def prepare_params(gamma, beta, weight, bias):
    """One-time parameter prep (hoisted out of the forward pass).

    Folds the LayerNorm affine into the Linear head:
        LN(x) @ W.T + b == ((x - mean) * rsqrt(var + eps)) @ (gamma[:, None] * W.T)
                           + (b + beta @ W.T)
    and pre-transposes / class-pads / bf16-casts the weight for the kernel.
    """
    C, D = weight.shape
    Cp = _round_up(C, 128)  # lane-dense class dim for the MXU and output stores
    w_t = weight.astype(jnp.float32).T                                   # (D, C)
    w_fold = gamma.astype(jnp.float32)[:, None] * w_t                    # fold gamma
    b_fold = bias.astype(jnp.float32) + beta.astype(jnp.float32) @ w_t   # fold beta
    w_fold = jnp.pad(w_fold, ((0, 0), (0, Cp - C))).astype(jnp.bfloat16)
    b_fold = jnp.pad(b_fold, (0, Cp - C)).reshape(1, Cp).astype(jnp.float32)
    return w_fold, b_fold, C


def _choose_tiles(M, D, Cp, x_itemsize, o_itemsize):
    # Class tile: shrink until the (double-buffered) bf16 weight tile uses at most
    # half the VMEM budget (keeps huge heads within v7x's 64 MiB VMEM).
    tn = Cp
    while tn > 128 and 2 * (D * tn * 2) > _VMEM_TARGET // 2:
        tn = _round_up(_cdiv(tn, 2), 128)

    def footprint(tm):
        return (2 * tm * D * x_itemsize      # streamed x tile (double-buffered)
                + 2 * tm * tn * o_itemsize   # output tile (double-buffered)
                + 2 * D * tn * 2             # bf16 weight tile
                + 2 * tn * 4)                # folded bias

    # Row tile: large tiles amortize per-step overhead; shrink to fit the budget.
    tm = 512
    while tm > 8 and footprint(tm) > _VMEM_TARGET:
        tm //= 2
    tm = min(tm, _round_up(M, 8))
    # Keep at least 2 row steps when possible so the 'parallel' row axis can feed
    # both v7x TensorCores.
    if M > 8 and _cdiv(M, tm) < 2:
        tm = _round_up(_cdiv(M, 2), 8)
    tm = max(8, _round_up(tm, 8))
    return tm, tn, footprint(tm)


def aux_head_forward(x, w_fold, b_fold, num_classes):
    """x: (B, N, feat_dim); w_fold/b_fold from prepare_params. Returns (B, N, num_classes)."""
    B, N, D = x.shape
    M = B * N
    Cp = w_fold.shape[1]
    out_dtype = x.dtype

    tm, tn, fp = _choose_tiles(M, D, Cp, x.dtype.itemsize, jnp.dtype(out_dtype).itemsize)
    grid = (_cdiv(M, tm), _cdiv(Cp, tn))

    x2 = x.reshape(M, D)  # no dtype change, no padding -> no extra HBM pass

    # Note: w_fold / b_fold are grid-invariant; they could additionally be
    # single-buffered (pl.Buffered(1)) — left at the default since the class-tiled
    # weight already fits the VMEM budget.
    out2 = pl.pallas_call(
        aux_head_kernel,
        out_shape=jax.ShapeDtypeStruct((M, Cp), out_dtype),
        grid_spec=pltpu.PrefetchScalarGridSpec(
            num_scalar_prefetch=0,
            grid=grid,
            in_specs=[
                pl.BlockSpec((tm, D), lambda i, j: (i, 0)),   # x row tile (native dtype)
                pl.BlockSpec((D, tn), lambda i, j: (0, j)),   # folded bf16 weight tile
                pl.BlockSpec((1, tn), lambda i, j: (0, j)),   # folded bias tile
            ],
            out_specs=pl.BlockSpec((tm, tn), lambda i, j: (i, j)),
        ),
        compiler_params=pltpu.CompilerParams(
            dimension_semantics=("parallel", "parallel"),
            vmem_limit_bytes=int(fp + 16 * 1024 * 1024),
        ),
    )(x2, w_fold, b_fold)

    if Cp != num_classes:
        out2 = out2[:, :num_classes]
    return out2.reshape(B, N, num_classes)


def init_params(key, feat_dim, num_classes):
    # LayerNorm: weight=1, bias=0 (torch default).
    gamma = jnp.ones((feat_dim,), jnp.float32)
    beta = jnp.zeros((feat_dim,), jnp.float32)
    # Linear head: trunc_normal_(std=0.02) on weight, bias zeroed.
    w = 0.02 * jax.random.truncated_normal(
        key, -2.0, 2.0, (num_classes, feat_dim), jnp.float32)
    b = jnp.zeros((num_classes,), jnp.float32)
    return gamma, beta, w, b


def reference_forward(x, gamma, beta, weight, bias):
    mean = jnp.mean(x, axis=-1, keepdims=True)
    var = jnp.mean((x - mean) ** 2, axis=-1, keepdims=True)
    xn = (x - mean) / jnp.sqrt(var + LN_EPS) * gamma + beta
    return xn @ weight.T + bias


if __name__ == "__main__":
    B, N, D, C = 2, 8, 32, 16   # batch, seq, feat_dim, num_classes
    key = jax.random.PRNGKey(0)
    kx, kw = jax.random.split(key)

    x = jax.random.normal(kx, (B, N, D), jnp.float32)
    gamma, beta, w, b = init_params(kw, D, C)

    # Parameter prep hoisted out of the forward (done once, reused every call).
    w_fold, b_fold, num_classes = prepare_params(gamma, beta, w, b)

    out = aux_head_forward(x, w_fold, b_fold, num_classes)
    jax.block_until_ready(out)

    ref = reference_forward(x, gamma, beta, w, b)
    assert out.shape == (B, N, C)
    # bf16 GEMM inputs (f32 accumulation) -> loosen tolerance vs. pure-f32 reference.
    assert jnp.allclose(out, ref, atol=2e-2, rtol=2e-2), \
        f"max abs diff {jnp.max(jnp.abs(out - ref))}"

    print("KERNEL_OK")
</pallas_src>

<mosaic_0001>
module attributes {stable_mosaic.version = 11 : i64} {
  func.func @aux_head_kernel(%arg0: i32, %arg1: i32, %arg2: memref<8x32xf32, #tpu.memory_space<vmem>>, %arg3: memref<32x128xbf16, #tpu.memory_space<vmem>>, %arg4: memref<1x128xf32, #tpu.memory_space<vmem>>, %arg5: memref<8x128xf32, #tpu.memory_space<vmem>>) attributes {dimension_semantics = [#tpu.dimension_semantics<parallel>, #tpu.dimension_semantics<parallel>], iteration_bounds = array<i64: 2, 1>, scalar_prefetch = 0 : i64, scratch_operands = 0 : i64, tpu.core_type = #tpu.core_type<tc>, window_params = [{transform_indices = @transform_0, window_bounds = array<i64: 8, 32>}, {transform_indices = @transform_1, window_bounds = array<i64: 32, 128>}, {transform_indices = @transform_2, window_bounds = array<i64: 1, 128>}, {transform_indices = @transform_3, window_bounds = array<i64: 8, 128>}]} {
    %c0 = arith.constant 0 : index
    %c0_0 = arith.constant 0 : index
    %0 = vector.load %arg2[%c0, %c0_0] : memref<8x32xf32, #tpu.memory_space<vmem>>, vector<8x32xf32>
    %cst = arith.constant dense<0.000000e+00> : vector<8xf32>
    %1 = vector.multi_reduction <add>, %0, %cst [1] : vector<8x32xf32> to vector<8xf32>
    %2 = vector.shape_cast %1 : vector<8xf32> to vector<8x1xf32>
    %3 = arith.mulf %0, %0 : vector<8x32xf32>
    %cst_1 = arith.constant dense<0.000000e+00> : vector<8xf32>
    %4 = vector.multi_reduction <add>, %3, %cst_1 [1] : vector<8x32xf32> to vector<8xf32>
    %5 = vector.shape_cast %4 : vector<8xf32> to vector<8x1xf32>
    %cst_2 = arith.constant 3.125000e-02 : f32
    %6 = vector.broadcast %cst_2 : f32 to vector<8x1xf32>
    %7 = arith.mulf %2, %6 : vector<8x1xf32>
    %cst_3 = arith.constant 3.125000e-02 : f32
    %8 = vector.broadcast %cst_3 : f32 to vector<8x1xf32>
    %9 = arith.mulf %5, %8 : vector<8x1xf32>
    %10 = arith.mulf %7, %7 : vector<8x1xf32>
    %11 = arith.subf %9, %10 : vector<8x1xf32>
    %cst_4 = arith.constant 0.000000e+00 : f32
    %12 = vector.broadcast %cst_4 : f32 to vector<8x1xf32>
    %13 = arith.maximumf %11, %12 : vector<8x1xf32>
    %14 = vector.broadcast %7 : vector<8x1xf32> to vector<8x32xf32>
    %15 = arith.subf %0, %14 : vector<8x32xf32>
    %cst_5 = arith.constant 9.99999974E-6 : f32
    %16 = vector.broadcast %cst_5 : f32 to vector<8x1xf32>
    %17 = arith.addf %13, %16 : vector<8x1xf32>
    %18 = math.rsqrt %17 : vector<8x1xf32>
    %19 = vector.broadcast %18 : vector<8x1xf32> to vector<8x32xf32>
    %20 = arith.mulf %15, %19 : vector<8x32xf32>
    %21 = arith.truncf %20 : vector<8x32xf32> to vector<8x32xbf16>
    %c0_6 = arith.constant 0 : index
    %c0_7 = arith.constant 0 : index
    %22 = vector.load %arg3[%c0_6, %c0_7] : memref<32x128xbf16, #tpu.memory_space<vmem>>, vector<32x128xbf16>
    %cst_8 = arith.constant dense<0.000000e+00> : vector<8x128xf32>
    %23 = tpu.matmul %21, %22, %cst_8 {dimension_numbers = #tpu.dot_dimension_numbers<[1], [0], [0], [1], [0, 0, 1, 1], [], []>} : vector<8x32xbf16>, vector<32x128xbf16>, vector<8x128xf32> -> vector<8x128xf32>
    %c0_9 = arith.constant 0 : index
    %c0_10 = arith.constant 0 : index
    %24 = vector.load %arg4[%c0_9, %c0_10] : memref<1x128xf32, #tpu.memory_space<vmem>>, vector<1x128xf32>
    %25 = vector.broadcast %24 : vector<1x128xf32> to vector<8x128xf32>
    %26 = arith.addf %23, %25 : vector<8x128xf32>
    %c0_11 = arith.constant 0 : index
    %c0_12 = arith.constant 0 : index
    %27 = vector.load %arg5[%c0_11, %c0_12] : memref<8x128xf32, #tpu.memory_space<vmem>>, vector<8x128xf32>
    tpu.vector_store %arg5[%c0_11, %c0_12], %26 {strides = array<i32>} : memref<8x128xf32, #tpu.memory_space<vmem>>, vector<8x128xf32>,
    return
  }
  func.func @transform_0(%arg0: i32, %arg1: i32) -> (i32, i32) {
    %c0_i32 = arith.constant 0 : i32
    %c0_i32_0 = arith.constant 0 : i32
    return %arg0, %c0_i32 : i32, i32
  }
  func.func @transform_1(%arg0: i32, %arg1: i32) -> (i32, i32) {
    %c0_i32 = arith.constant 0 : i32
    %c0_i32_0 = arith.constant 0 : i32
    return %c0_i32, %arg1 : i32, i32
  }
  func.func @transform_2(%arg0: i32, %arg1: i32) -> (i32, i32) {
    %c0_i32 = arith.constant 0 : i32
    %c0_i32_0 = arith.constant 0 : i32
    return %c0_i32, %arg1 : i32, i32
  }
  func.func @transform_3(%arg0: i32, %arg1: i32) -> (i32, i32) {
    %c0_i32 = arith.constant 0 : i32
    return %arg0, %arg1 : i32, i32
  }
}

</mosaic_0001>

<llo_original>
// kernel: tpu_custom_call.1
$region0: #{tpu_custom_call.1}
  #allocation0 [shape = 'u32[]', space=smem, size = 0x4, offset = 0x4, fixed_abs, tag = 'smem constant byte address 0x4 - core index']
  #allocation1 [shape = 'u32[144,128]{1,0:T(1,128)}', space=vmem, size = 0x12000, scoped, tag = 'internal scratch']
  %s0 = inlined_call_operand.hbm [shape: f32[16,32], index: 0, kind: input, shape index: {}]
  %s1 = inlined_call_operand.hbm [shape: bf16[32,128], index: 1, kind: input, shape index: {}]
  %s2 = inlined_call_operand.vmem [shape: f32[1,128], index: 2, kind: input, shape index: {}]
  %s3 = inlined_call_operand.hbm [shape: f32[16,128], index: 3, kind: output, shape index: {}]
  %s4 = sld [smem:[#allocation0]]
  $region53: #{tpu_custom_call.1} parent=0
    _
  %s6 = ssub.s32 1, %s4
  %s7 = scalar_select 0, %s6, %s4
  $region1: #{tpu_custom_call.1} parent=0
    #allocation2 [shape = 'u8[8192]{0}', space=vmem, size = 0x2000, scoped, tag = 'input window, operand 0']
    #allocation3 [shape = 's32[2]{0}', space=sflag, size = 0x8, scoped, tag = 'scoped memory for tpu_custom_call.1']
    #allocation4 [shape = 's32[2]{0}', space=sflag, size = 0x8, scoped, tag = 'scoped memory for tpu_custom_call.1']
    #allocation5 [shape = 'u8[8192]{0}', space=vmem, size = 0x2000, scoped, tag = 'input window, operand 1, single buffered']
    #allocation6 [shape = 's32[1]{0}', space=sflag, size = 0x4, scoped, tag = 'scoped memory for tpu_custom_call.1']
    #allocation7 [shape = 'u8[8192]{0}', space=vmem, size = 0x2000, scoped, tag = 'output window, operand 0']
    %8 = vsyncpa [#allocation3], 0
    %s9 = scalar_lea.sflag [#allocation3], 1
    %10 = vsyncpa %s9, 0
    %11 = vsyncpa [#allocation6], 0
    %12 = vsyncpa [#allocation4], 0
    %s13 = scalar_lea.sflag [#allocation4], 1
    %14 = vsyncpa %s13, 0
    loop: start=0, step=1, limit=4
    $region2: #{tpu_custom_call.1} parent=1 // loop_pre_header
      _
    $region3: #{tpu_custom_call.1} parent=1 // loop_header
      %s16 = sphi 0, %s20
      %p17 = scmp.ge.s32.totalorder %s16, 4
      %s23 = sphi 0, %s35
      %s24 = sphi 0, %s31
      %s25 = sphi 0, %s23
      %s26 = sphi 0, %s24
      %s27 = sphi 0, %s25
      %s28 = sphi 0, %s26
      %s38 = sphi 0, %s40
      %s41 = sphi 0, %s38
      %s42 = sphi 0, %s41
      %s58 = sphi 0, %s42
      %s64 = sphi 0, %s66
      %s67 = sphi 0, %s64
      %s68 = sphi 0, %s67
      %s84 = sphi 0, %s68
      %s90 = sphi 0, %s92
      %s93 = sphi 0, %s90
      %s94 = sphi 0, %s93
      %s110 = sphi 0, %s94
      %s118 = sphi 0, %s120
      %s121 = sphi 0, %s118
      %s122 = sphi 0, %s121
      %s138 = sphi 0, %s122
    $region4: #{tpu_custom_call.1} parent=1 // loop_header_branch
      %19 = sbr.rel (%p17) target = $region8
    $region5: #{tpu_custom_call.1} parent=1 // loop_body
      %s21 = ssub.s32 %s16, 1
      %s22 = ssub.s32 %s16, 2
      %s29 = sadd.s32 1, %s24
      %p30 = scmp.ge.s32.totalorder %s29, 1
      %s31 = scalar_select %p30, 0, %s29
      %s32 = sadd.s32 1, %s23
      %s33 = scalar_select %p30, %s32, %s23
      %p34 = scmp.ge.s32.totalorder %s33, 2
      %s35 = scalar_select %p34, 0, %s33
      %s36 = ssub.s32 %s23, %s35
      %p37 = scmp.eq.s32.totalorder %s36, 0
      %s39 = sadd.s32 %s38, 1
      %s40 = scalar_select %p37, %s38, %s39
      %p43 = pneg %p37
      %p44 = scmp.eq.s32.totalorder %s16, 1
      %p45 = por %p43, %p44
      %p46 = scmp.ne.s32.totalorder %s38, %s41
      %p47 = scmp.eq.s32.totalorder %s16, 0
      %p48 = por %p46, %p47
      %p49 = scmp.ne.s32.totalorder %s38, %s41
      %p50 = scmp.eq.s32.totalorder %s21, 1
      %p51 = por %p49, %p50
      %p52 = scmp.ne.s32.totalorder %s41, %s42
      %p53 = scmp.eq.s32.totalorder %s21, 0
      %p54 = por %p52, %p53
      %p55 = scmp.ne.s32.totalorder %s41, %s42
      %p56 = scmp.eq.s32.totalorder %s22, 1
      %p57 = por %p55, %p56
      %p59 = scmp.ne.s32.totalorder %s42, %s58
      %p60 = scmp.eq.s32.totalorder %s22, 0
      %p61 = por %p59, %p60
      %s62 = ssub.s32 %s24, %s31
      %p63 = scmp.eq.s32.totalorder %s62, 0
      %s65 = sadd.s32 %s64, 1
      %s66 = scalar_select %p63, %s64, %s65
      %p69 = pneg %p63
      %p70 = scmp.eq.s32.totalorder %s16, 1
      %p71 = por %p69, %p70
      %p72 = scmp.ne.s32.totalorder %s64, %s67
      %p73 = scmp.eq.s32.totalorder %s16, 0
      %p74 = por %p72, %p73
      %p75 = scmp.ne.s32.totalorder %s64, %s67
      %p76 = scmp.eq.s32.totalorder %s21, 1
      %p77 = por %p75, %p76
      %p78 = scmp.ne.s32.totalorder %s67, %s68
      %p79 = scmp.eq.s32.totalorder %s21, 0
      %p80 = por %p78, %p79
      %p81 = scmp.ne.s32.totalorder %s67, %s68
      %p82 = scmp.eq.s32.totalorder %s22, 1
      %p83 = por %p81, %p82
      %p85 = scmp.ne.s32.totalorder %s68, %s84
      %p86 = scmp.eq.s32.totalorder %s22, 0
      %p87 = por %p85, %p86
      %s88 = ssub.s32 %s24, %s31
      %p89 = scmp.eq.s32.totalorder %s88, 0
      %s91 = sadd.s32 %s90, 1
      %s92 = scalar_select %p89, %s90, %s91
      %p95 = pneg %p89
      %p96 = scmp.eq.s32.totalorder %s16, 1
      %p97 = por %p95, %p96
      %p98 = scmp.ne.s32.totalorder %s90, %s93
      %p99 = scmp.eq.s32.totalorder %s16, 0
      %p100 = por %p98, %p99
      %p101 = scmp.ne.s32.totalorder %s90, %s93
      %p102 = scmp.eq.s32.totalorder %s21, 1
      %p103 = por %p101, %p102
      %p104 = scmp.ne.s32.totalorder %s93, %s94
      %p105 = scmp.eq.s32.totalorder %s21, 0
      %p106 = por %p104, %p105
      %p107 = scmp.ne.s32.totalorder %s93, %s94
      %p108 = scmp.eq.s32.totalorder %s22, 1
      %p109 = por %p107, %p108
      %p111 = scmp.ne.s32.totalorder %s94, %s110
      %p112 = scmp.eq.s32.totalorder %s22, 0
      %p113 = por %p111, %p112
      %s114 = ssub.s32 %s23, %s35
      %s115 = ssub.s32 %s24, %s31
      %s116 = sor.u32 %s114, %s115
      %p117 = scmp.eq.s32.totalorder %s116, 0
      %s119 = sadd.s32 %s118, 1
      %s120 = scalar_select %p117, %s118, %s119
      %p123 = pneg %p117
      %p124 = scmp.eq.s32.totalorder %s16, 1
      %p125 = por %p123, %p124
      %p126 = scmp.ne.s32.totalorder %s118, %s121
      %p127 = scmp.eq.s32.totalorder %s16, 0
      %p128 = por %p126, %p127
      %p129 = scmp.ne.s32.totalorder %s118, %s121
      %p130 = scmp.eq.s32.totalorder %s21, 1
      %p131 = por %p129, %p130
      %p132 = scmp.ne.s32.totalorder %s121, %s122
      %p133 = scmp.eq.s32.totalorder %s21, 0
      %p134 = por %p132, %p133
      %p135 = scmp.ne.s32.totalorder %s121, %s122
      %p136 = scmp.eq.s32.totalorder %s22, 1
      %p137 = por %p135, %p136
      %p139 = scmp.ne.s32.totalorder %s122, %s138
      %p140 = scmp.eq.s32.totalorder %s22, 0
      %p141 = por %p139, %p140
      %p142 = scmp.le.s32.totalorder 1, %s16
      %p143 = scmp.lt.s32.totalorder %s16, 3
      %p144 = pnand %p142, %p143
      %p145 = pneg %p144
      // Predicated region
      $region9: #{tpu_custom_call.1} parent=5 // pred_check
        _
      $region10: #{tpu_custom_call.1} parent=5 // pred_check_branch
        %147 = sbr.rel (%p144) target = $region12
      $region11: #{tpu_custom_call.1} parent=5 // pred_region
        %s148 = ssub.s32 %s16, 1
        // Predicated region
        $region13: #{tpu_custom_call.1} parent=11 // pred_check
          %p149 = pneg %p80
        $region14: #{tpu_custom_call.1} parent=11 // pred_check_branch
          %151 = sbr.rel (%p149) target = $region16
        $region15: #{tpu_custom_call.1} parent=11 // pred_region
          %s153 = ssub.s32 256, 256
          %154 = vsyncadd [#allocation6], %s153
          %s155 = smul.addr %s26, 64
          %s156 = scalar_lea.hbm %s1, %s155
          %s157 = sshll.u32 [#allocation5], 4
          %s158 = int_to_ptr.vmem [resolvable:$true] %s157
          %163 = dma.hbm_to_vmem [thread:$0]  %s156, 256, %s158, [#allocation6], 64, 64, 4
        $region16: #{tpu_custom_call.1} parent=11 // pred_fallthru
          _
        // Predicated region
        $region17: #{tpu_custom_call.1} parent=11 // pred_check
          %p164 = pneg %p106
        $region18: #{tpu_custom_call.1} parent=11 // pred_check_branch
          %166 = sbr.rel (%p164) target = $region20
        $region19: #{tpu_custom_call.1} parent=11 // pred_region
          %p167 = scmp.lt.s32.totalorder %s26, 0
          %s168 = scalar_select %p167, %s26, 0
          %s169 = scalar_lea.vmem %s2, %s168
        $region20: #{tpu_custom_call.1} parent=11 // pred_fallthru
          _
      $region12: #{tpu_custom_call.1} parent=5 // pred_fallthru
        _
      %p170 = scmp.lt.s32.totalorder %s16, 2
      // Predicated region
      $region21: #{tpu_custom_call.1} parent=5 // pred_check
        %p171 = pneg %p170
      $region22: #{tpu_custom_call.1} parent=5 // pred_check_branch
        %173 = sbr.rel (%p171) target = $region24
      $region23: #{tpu_custom_call.1} parent=5 // pred_region
        // Predicated region
        $region25: #{tpu_custom_call.1} parent=23 // pred_check
          %p174 = pneg %p48
        $region26: #{tpu_custom_call.1} parent=23 // pred_check_branch
          %176 = sbr.rel (%p174) target = $region28
        $region27: #{tpu_custom_call.1} parent=23 // pred_region
          %s177 = sand.u32 %s38, 1
          %s178 = scalar_lea.sflag [#allocation3], %s177
          %s179 = sand.u32 %s38, 1
          %s180 = smul.addr %s179, 8
          %s181 = scalar_lea.vmem [#allocation2], %s180
          %s183 = ssub.s32 128, 128
          %184 = vsyncadd %s178, %s183
          %s185 = smul.addr %s23, 128
          %s186 = scalar_lea.hbm %s0, %s185
          %s188 = sshll.u32 %s181, 4
          %s189 = int_to_ptr.vmem [resolvable:$true] %s188
          %191 = dma.hbm_to_vmem [thread:$0]  %s186, 128, %s189, %s178
        $region28: #{tpu_custom_call.1} parent=23 // pred_fallthru
          _
      $region24: #{tpu_custom_call.1} parent=5 // pred_fallthru
        _
      %p192 = scmp.le.s32.totalorder 1, %s16
      %p193 = scmp.lt.s32.totalorder %s16, 3
      %p194 = pnand %p192, %p193
      %p195 = pneg %p194
      // Predicated region
      $region29: #{tpu_custom_call.1} parent=5 // pred_check
        _
      $region30: #{tpu_custom_call.1} parent=5 // pred_check_branch
        %197 = sbr.rel (%p194) target = $region32
      $region31: #{tpu_custom_call.1} parent=5 // pred_region
        %s198 = ssub.s32 %s16, 1
        %s199 = sand.u32 %s41, 1
        %s200 = scalar_lea.sflag [#allocation3], %s199
        %s201 = sand.u32 %s41, 1
        %s202 = smul.addr %s201, 8
        %s203 = scalar_lea.vmem [#allocation2], %s202
        // Predicated region
        $region33: #{tpu_custom_call.1} parent=31 // pred_check
          %p204 = pneg %p54
        $region34: #{tpu_custom_call.1} parent=31 // pred_check_branch
          %206 = sbr.rel (%p204) target = $region36
        $region35: #{tpu_custom_call.1} parent=31 // pred_region
          %207 = dma.done %s200, 128
        $region36: #{tpu_custom_call.1} parent=31 // pred_fallthru
          _
        // Predicated region
        $region37: #{tpu_custom_call.1} parent=31 // pred_check
          %p208 = pneg %p80
        $region38: #{tpu_custom_call.1} parent=31 // pred_check_branch
          %210 = sbr.rel (%p208) target = $region40
        $region39: #{tpu_custom_call.1} parent=31 // pred_region
          %211 = dma.done [#allocation6], 256
        $region40: #{tpu_custom_call.1} parent=31 // pred_fallthru
          _
        %s212 = sand.u32 %s41, 1
        %s213 = scalar_lea.sflag [#allocation3], %s212
        %s214 = sand.u32 %s41, 1
        %s215 = smul.addr %s214, 8
        %s216 = scalar_lea.vmem [#allocation2], %s215
        %p217 = pneg %p54
        %p218 = pneg %p51
        %p219 = pneg %p80
        %p220 = pneg %p77
        %p221 = scmp.lt.s32.totalorder %s26, 0
        %s222 = scalar_select %p221, %s26, 0
        %s223 = scalar_lea.vmem %s2, %s222
        %p224 = pneg %p106
        %p225 = pneg %p103
        %p226 = pneg %p134
        %p227 = pneg %p131
        %s228 = sand.u32 %s121, 1
        %s229 = scalar_lea.sflag [#allocation4], %s228
        %s230 = sand.u32 %s121, 1
        %s231 = smul.addr %s230, 8
        %s232 = scalar_lea.vmem [#allocation7], %s231
        %p233 = scmp.lt.s32.totalorder %s26, 0
        %s234 = scalar_select %p233, %s26, 0
        %s235 = scalar_lea.vmem %s2, %s234
        %v237 = vld [vmem:[%s203] sm:$0xff]
        %vm238 = vcmask 261120
        %v239 = vsel %vm238, %v237, 0.0
        %240 = vadd.xlane.f32.xlu0 %v239
        %v241 = vpop.xlane.xlu0 %240
        %v242 = vmul.f32 %v237, %v237
        %v243 = vsel %vm238, %v242, 0.0
        %244 = vadd.xlane.f32.xlu0 %v243
        %v245 = vpop.xlane.xlu0 %244
        %v246 = vmul.f32 %v241, 0.03125
        %v247 = vmul.f32 %v245, 0.03125
        %v248 = vmul.f32 %v246, %v246
        %v249 = vsub.f32 %v247, %v248
        %v250 = vmax.f32 %v249, 0.0
        %v251 = vsub.f32 %v237, %v246
        %v252 = vadd.f32 %v250, 1e-05
        %v253 = vrsqrt.pop %v252
        %v254 = vmul.f32 %v251, %v253
        %v255 = vpack.c.bf16 %v254, %v254
        %v256 = vld [vmem:[#allocation5] sm:$0xf]
        %v257 = vld [vmem:[#allocation5 + $0x4] sm:$0xf]
        %v258 = vld [vmem:[#allocation5 + $0x8] sm:$0xf]
        %v259 = vld [vmem:[#allocation5 + $0xc] sm:$0xf]
        %v260 = vld [vmem:[%s235] sm:$0x1]
        %v262 = vlaneseq
        %v263 = vshrl.u32 %v262, 7
        %v264 = vsub.s32 0, %v263
        %v265 = vrot.slane %v260, %v264
        %v271 = vunpack.c.l.b16 %v256
        %v272 = vunpack.c.l.b16 %v257
        %v273 = vunpack.c.l.b16 %v258
        %v274 = vunpack.c.l.b16 %v259
        %v275 = vpack.c.b16 %v272, %v271
        %v276 = vpack.c.b16 %v274, %v273
        %v280 = vsel %vm238, %v255, 0
        %282 = vmatprep.subr.bf16.mxu0 0
        %283 = vmatpush1.bf16.msra.mxu0 %v275
        %284 = vmatprep.subr.bf16.mxu0 0
        %285 = vmatpush1.bf16.msra.mxu0 %v276
        %286 = vmatprep.subr.bf16.mxu0 0
        %287 = vmatpush1.bf16.msra.mxu0 0
        %288 = vmatprep.subr.bf16.mxu0 0
        %289 = vmatpush1.bf16.msra.mxu0 0
        %290 = vmatprep.subr.bf16.mxu0 0
        %291 = vmatpush1.bf16.msra.mxu0 0
        %292 = vmatprep.subr.bf16.mxu0 0
        %293 = vmatpush1.bf16.msra.mxu0 0
        %294 = vmatprep.subr.bf16.mxu0 0
        %295 = vmatpush1.bf16.msra.mxu0 0
        %296 = vmatprep.subr.bf16.mxu0 0
        %297 = vmatpush1.bf16.msra.mxu0 0
        %298 = vmatprep.subr.bf16.mxu0 0
        %299 = vmatpush1.bf16.msra.mxu0 0
        %300 = vmatprep.subr.bf16.mxu0 0
        %301 = vmatpush1.bf16.msra.mxu0 0
        %302 = vmatprep.subr.bf16.mxu0 0
        %303 = vmatpush1.bf16.msra.mxu0 0
        %304 = vmatprep.subr.bf16.mxu0 0
        %305 = vmatpush1.bf16.msra.mxu0 0
        %306 = vmatprep.subr.bf16.mxu0 0
        %307 = vmatpush1.bf16.msra.mxu0 0
        %308 = vmatprep.subr.bf16.mxu0 0
        %309 = vmatpush1.bf16.msra.mxu0 0
        %310 = vmatprep.subr.bf16.mxu0 0
        %311 = vmatpush1.bf16.msra.mxu0 0
        %312 = vmatprep.subr.bf16.mxu0 0
        %313 = vmatpush1.bf16.msra.mxu0 0
        %314 = vmatprep.mubr.bf16.mxu0 0
        %315 = vmatmul.mubr.bf16.gmra.mrb[0].mxu0 %v280
        %v316 = vpop.f32.mrb[0].mxu0
        %v317 = vadd.f32 %v265, %v316
        %v318 = vpop.f32.mrb[0].mxu0
        %v319 = vpop.f32.mrb[0].mxu0
        %v320 = vpop.f32.mrb[0].mxu0
        %321 = vdwg.mxu0
        %322 = vst [vmem:[%s232] sm:$0xff] %v317
        %s323 = sand.u32 %s121, 1
        %s324 = scalar_lea.sflag [#allocation4], %s323
        %s325 = sand.u32 %s121, 1
        %s326 = smul.addr %s325, 8
        %s327 = scalar_lea.vmem [#allocation7], %s326
        // Predicated region
        $region41: #{tpu_custom_call.1} parent=31 // pred_check
          %p328 = pneg %p131
        $region42: #{tpu_custom_call.1} parent=31 // pred_check_branch
          %330 = sbr.rel (%p328) target = $region44
        $region43: #{tpu_custom_call.1} parent=31 // pred_region
          %s332 = ssub.s32 128, 128
          %333 = vsyncadd %s324, %s332
          %s334 = sadd.s32 %s26, %s25
          %s335 = smul.addr %s334, 128
          %s336 = scalar_lea.hbm %s3, %s335
          %s338 = sshll.u32 %s327, 4
          %s339 = int_to_ptr.vmem [resolvable:$true] %s338
          %341 = dma.vmem_to_hbm [thread:$0]  %s339, 128, %s336, %s324
        $region44: #{tpu_custom_call.1} parent=31 // pred_fallthru
          _
      $region32: #{tpu_custom_call.1} parent=5 // pred_fallthru
        _
      %p342 = scmp.le.s32.totalorder 2, %s16
      // Predicated region
      $region45: #{tpu_custom_call.1} parent=5 // pred_check
        %p343 = pneg %p342
      $region46: #{tpu_custom_call.1} parent=5 // pred_check_branch
        %345 = sbr.rel (%p343) target = $region48
      $region47: #{tpu_custom_call.1} parent=5 // pred_region
        %s346 = ssub.s32 %s16, 2
        // Predicated region
        $region49: #{tpu_custom_call.1} parent=47 // pred_check
          %p347 = pneg %p137
        $region50: #{tpu_custom_call.1} parent=47 // pred_check_branch
          %349 = sbr.rel (%p347) target = $region52
        $region51: #{tpu_custom_call.1} parent=47 // pred_region
          %s350 = sand.u32 %s122, 1
          %s351 = scalar_lea.sflag [#allocation4], %s350
          %s352 = sand.u32 %s122, 1
          %s353 = smul.addr %s352, 8
          %s354 = scalar_lea.vmem [#allocation7], %s353
          %355 = dma.done %s351, 128
        $region52: #{tpu_custom_call.1} parent=47 // pred_fallthru
          _
      $region48: #{tpu_custom_call.1} parent=5 // pred_fallthru
        _
    $region6: #{tpu_custom_call.1} parent=1 // loop_footer
      %s20 = sadd.s32 1, %s16
    $region7: #{tpu_custom_call.1} parent=1 // loop_footer_branch
      %15 = sbr.rel target = $region3
    $region8: #{tpu_custom_call.1} parent=1 // loop_exit
      _
    %356 = vsyncpa [#allocation3], 1
    %s357 = scalar_lea.sflag [#allocation3], 1
    %358 = vsyncpa %s357, 1
    %359 = vsyncpa [#allocation6], 1
    %360 = vsyncpa [#allocation4], 1
    %s361 = scalar_lea.sflag [#allocation4], 1
    %362 = vsyncpa %s361, 1

</llo_original>
